<compile_context>
chip_gen: v7x
topology: tpu7x:2x2x1
jax: 0.10.0
libtpu: 0.0.40
codegen_flags: <defaults>
</compile_context>

<pallas_src>
import jax
import jax.numpy as jnp
from jax.experimental import pallas as pl
from jax.experimental.pallas import tpu as pltpu


def mlp_kernel(x_ref, w1_ref, b1_ref, w2_ref, b2_ref, w3_ref, b3_ref, o_ref):
    # Layer 1: Linear + ReLU  (MXU matmul, f32 accumulate; elementwise in f32)
    h1 = jnp.dot(x_ref[...], w1_ref[...], preferred_element_type=jnp.float32)
    h1 = jnp.maximum(h1 + b1_ref[...], 0.0)
    # Layer 2: Linear + ReLU
    h2 = jnp.dot(h1.astype(w2_ref.dtype), w2_ref[...],
                 preferred_element_type=jnp.float32)
    h2 = jnp.maximum(h2 + b2_ref[...], 0.0)
    # Layer 3: Linear + Sigmoid (sigmoid -> EUP slot, co-issues with VALU work)
    logits = jnp.dot(h2.astype(w3_ref.dtype), w3_ref[...],
                     preferred_element_type=jnp.float32) + b3_ref[...]
    o_ref[...] = jax.nn.sigmoid(logits).astype(o_ref.dtype)


def mlp_forward(x, params, *, batch_tile=512, use_bf16_inputs=False):
    """x: (B, in_features) f32. params: (w1, b1, w2, b2, w3, b3), W as (in, out)."""
    w1, b1, w2, b2, w3, b3 = params
    B, in_size = x.shape
    h1_size, h2_size, out_size = w1.shape[1], w2.shape[1], w3.shape[1]

    if use_bf16_inputs:
        # MXU inputs only; biases + accumulation + elementwise stay f32.
        x = x.astype(jnp.bfloat16)
        w1, w2, w3 = (w.astype(jnp.bfloat16) for w in (w1, w2, w3))

    # Batch tile: large enough to amortize per-step overhead and the MXU weight
    # push, small enough that 2x double-buffered (x, out) tiles + resident
    # weights fit the scoped-VMEM default on every generation (weights here are
    # a few KB, so this is comfortably within budget even on v7x's 64 MiB VMEM).
    TB = min(batch_tile, B)
    if B >= 8:
        TB = max(8, TB - TB % 8)          # keep sublane (8) alignment
    B_pad = pl.cdiv(B, TB) * TB
    if B_pad != B:
        x = jnp.pad(x, ((0, B_pad - B), (0, 0)))
    grid = (B_pad // TB,)

    flops = 2 * B_pad * (in_size * h1_size + h1_size * h2_size + h2_size * out_size)
    bytes_accessed = (
        x.size * x.dtype.itemsize
        + sum(a.size * a.dtype.itemsize for a in (w1, b1, w2, b2, w3, b3))
        + B_pad * out_size * 4
    )
    cost = pl.CostEstimate(
        flops=flops,
        transcendentals=B_pad * out_size,    # one exp per output element
        bytes_accessed=bytes_accessed,
    )

    def resident(a):
        # Weights / biases: same block every grid step -> loaded once, stays in VMEM.
        return pl.BlockSpec(a.shape, lambda i: tuple(0 for _ in a.shape))

    out = pl.pallas_call(
        mlp_kernel,
        out_shape=jax.ShapeDtypeStruct((B_pad, out_size), jnp.float32),
        grid=grid,
        in_specs=[
            pl.BlockSpec((TB, in_size), lambda i: (i, 0)),   # x: streamed, double-buffered
            resident(w1), resident(b1),
            resident(w2), resident(b2),
            resident(w3), resident(b3),
        ],
        out_specs=pl.BlockSpec((TB, out_size), lambda i: (i, 0)),
        compiler_params=pltpu.CompilerParams(
            dimension_semantics=("parallel",),   # v7x: shard batch tiles across both TCs
        ),
        cost_estimate=cost,
    )(x, w1, b1, w2, b2, w3, b3)

    return out[:B] if B_pad != B else out


def init_linear(key, fan_in, fan_out):
    # Matches torch.nn.Linear default init: U(-1/sqrt(fan_in), 1/sqrt(fan_in))
    kw, kb = jax.random.split(key)
    bound = 1.0 / jnp.sqrt(fan_in)
    w = jax.random.uniform(kw, (fan_in, fan_out), jnp.float32, -bound, bound)
    b = jax.random.uniform(kb, (1, fan_out), jnp.float32, -bound, bound)
    return w, b


if __name__ == "__main__":
    key = jax.random.PRNGKey(0)
    k_x, k1, k2, k3 = jax.random.split(key, 4)

    batch = 8
    input_size = 16
    hidden1, hidden2, output_size = 64, 32, 1

    x = jax.random.normal(k_x, (batch, input_size), jnp.float32)
    w1, b1 = init_linear(k1, input_size, hidden1)
    w2, b2 = init_linear(k2, hidden1, hidden2)
    w3, b3 = init_linear(k3, hidden2, output_size)
    params = (w1, b1, w2, b2, w3, b3)

    out = mlp_forward(x, params)          # f32 path (bf16 MXU inputs available via flag)
    out = jax.block_until_ready(out)

    # Pure-JAX reference check
    ref = jnp.maximum(x @ w1 + b1, 0.0)
    ref = jnp.maximum(ref @ w2 + b2, 0.0)
    ref = jax.nn.sigmoid(ref @ w3 + b3)
    assert out.shape == (batch, output_size)
    assert jnp.allclose(out, ref, atol=1e-5), "mismatch vs reference"

    print("KERNEL_OK")
</pallas_src>

<mosaic_0001>
module attributes {stable_mosaic.version = 11 : i64} {
  func.func @mlp_kernel(%arg0: i32, %arg1: memref<8x16xf32, #tpu.memory_space<vmem>>, %arg2: memref<16x64xf32, #tpu.memory_space<vmem>>, %arg3: memref<1x64xf32, #tpu.memory_space<vmem>>, %arg4: memref<64x32xf32, #tpu.memory_space<vmem>>, %arg5: memref<1x32xf32, #tpu.memory_space<vmem>>, %arg6: memref<32x1xf32, #tpu.memory_space<vmem>>, %arg7: memref<1x1xf32, #tpu.memory_space<vmem>>, %arg8: memref<8x1xf32, #tpu.memory_space<vmem>>) attributes {dimension_semantics = [#tpu.dimension_semantics<parallel>], iteration_bounds = array<i64: 1>, scalar_prefetch = 0 : i64, scratch_operands = 0 : i64, tpu.core_type = #tpu.core_type<tc>, window_params = [{transform_indices = @transform_0, window_bounds = array<i64: 8, 16>}, {pipeline_mode = #tpu.pipeline_mode<synchronous>, transform_indices = @transform_1, window_bounds = array<i64: 16, 64>}, {pipeline_mode = #tpu.pipeline_mode<synchronous>, transform_indices = @transform_2, window_bounds = array<i64: 1, 64>}, {pipeline_mode = #tpu.pipeline_mode<synchronous>, transform_indices = @transform_3, window_bounds = array<i64: 64, 32>}, {pipeline_mode = #tpu.pipeline_mode<synchronous>, transform_indices = @transform_4, window_bounds = array<i64: 1, 32>}, {pipeline_mode = #tpu.pipeline_mode<synchronous>, transform_indices = @transform_5, window_bounds = array<i64: 32, 1>}, {pipeline_mode = #tpu.pipeline_mode<synchronous>, transform_indices = @transform_6, window_bounds = array<i64: 1, 1>}, {transform_indices = @transform_7, window_bounds = array<i64: 8, 1>}]} {
    %c0 = arith.constant 0 : index
    %c0_0 = arith.constant 0 : index
    %0 = vector.load %arg1[%c0, %c0_0] : memref<8x16xf32, #tpu.memory_space<vmem>>, vector<8x16xf32>
    %c0_1 = arith.constant 0 : index
    %c0_2 = arith.constant 0 : index
    %1 = vector.load %arg2[%c0_1, %c0_2] : memref<16x64xf32, #tpu.memory_space<vmem>>, vector<16x64xf32>
    %cst = arith.constant dense<0.000000e+00> : vector<8x64xf32>
    %2 = tpu.matmul %0, %1, %cst {dimension_numbers = #tpu.dot_dimension_numbers<[1], [0], [0], [1], [0, 0, 1, 1], [], []>} : vector<8x16xf32>, vector<16x64xf32>, vector<8x64xf32> -> vector<8x64xf32>
    %c0_3 = arith.constant 0 : index
    %c0_4 = arith.constant 0 : index
    %3 = vector.load %arg3[%c0_3, %c0_4] : memref<1x64xf32, #tpu.memory_space<vmem>>, vector<1x64xf32>
    %4 = vector.broadcast %3 : vector<1x64xf32> to vector<8x64xf32>
    %5 = arith.addf %2, %4 : vector<8x64xf32>
    %cst_5 = arith.constant 0.000000e+00 : f32
    %6 = vector.broadcast %cst_5 : f32 to vector<8x64xf32>
    %7 = arith.maximumf %5, %6 : vector<8x64xf32>
    %c0_6 = arith.constant 0 : index
    %c0_7 = arith.constant 0 : index
    %8 = vector.load %arg4[%c0_6, %c0_7] : memref<64x32xf32, #tpu.memory_space<vmem>>, vector<64x32xf32>
    %cst_8 = arith.constant dense<0.000000e+00> : vector<8x32xf32>
    %9 = tpu.matmul %7, %8, %cst_8 {dimension_numbers = #tpu.dot_dimension_numbers<[1], [0], [0], [1], [0, 0, 1, 1], [], []>} : vector<8x64xf32>, vector<64x32xf32>, vector<8x32xf32> -> vector<8x32xf32>
    %c0_9 = arith.constant 0 : index
    %c0_10 = arith.constant 0 : index
    %10 = vector.load %arg5[%c0_9, %c0_10] : memref<1x32xf32, #tpu.memory_space<vmem>>, vector<1x32xf32>
    %11 = vector.broadcast %10 : vector<1x32xf32> to vector<8x32xf32>
    %12 = arith.addf %9, %11 : vector<8x32xf32>
    %cst_11 = arith.constant 0.000000e+00 : f32
    %13 = vector.broadcast %cst_11 : f32 to vector<8x32xf32>
    %14 = arith.maximumf %12, %13 : vector<8x32xf32>
    %c0_12 = arith.constant 0 : index
    %c0_13 = arith.constant 0 : index
    %15 = vector.load %arg6[%c0_12, %c0_13] : memref<32x1xf32, #tpu.memory_space<vmem>>, vector<32x1xf32>
    %cst_14 = arith.constant dense<0.000000e+00> : vector<8x1xf32>
    %16 = tpu.matmul %14, %15, %cst_14 {dimension_numbers = #tpu.dot_dimension_numbers<[1], [0], [0], [1], [0, 0, 1, 1], [], []>} : vector<8x32xf32>, vector<32x1xf32>, vector<8x1xf32> -> vector<8x1xf32>
    %c0_15 = arith.constant 0 : index
    %c0_16 = arith.constant 0 : index
    %17 = vector.load %arg7[%c0_15, %c0_16] : memref<1x1xf32, #tpu.memory_space<vmem>>, vector<1x1xf32>
    %18 = vector.broadcast %17 : vector<1x1xf32> to vector<8x1xf32>
    %19 = arith.addf %16, %18 : vector<8x1xf32>
    %20 = arith.negf %19 : vector<8x1xf32>
    %21 = math.exp %20 : vector<8x1xf32>
    %cst_17 = arith.constant 1.000000e+00 : f32
    %22 = vector.broadcast %cst_17 : f32 to vector<8x1xf32>
    %23 = arith.addf %22, %21 : vector<8x1xf32>
    %24 = arith.divf %22, %23 : vector<8x1xf32>
    %c0_18 = arith.constant 0 : index
    %c0_19 = arith.constant 0 : index
    %25 = vector.load %arg8[%c0_18, %c0_19] : memref<8x1xf32, #tpu.memory_space<vmem>>, vector<8x1xf32>
    tpu.vector_store %arg8[%c0_18, %c0_19], %24 {strides = array<i32>} : memref<8x1xf32, #tpu.memory_space<vmem>>, vector<8x1xf32>,
    return
  }
  func.func @transform_0(%arg0: i32) -> (i32, i32) {
    %c0_i32 = arith.constant 0 : i32
    %c0_i32_0 = arith.constant 0 : i32
    return %arg0, %c0_i32 : i32, i32
  }
  func.func @transform_1(%arg0: i32) -> (i32, i32) {
    %c0_i32 = arith.constant 0 : i32
    %c0_i32_0 = arith.constant 0 : i32
    %c0_i32_1 = arith.constant 0 : i32
    return %c0_i32, %c0_i32_0 : i32, i32
  }
  func.func @transform_2(%arg0: i32) -> (i32, i32) {
    %c0_i32 = arith.constant 0 : i32
    %c0_i32_0 = arith.constant 0 : i32
    %c0_i32_1 = arith.constant 0 : i32
    return %c0_i32, %c0_i32_0 : i32, i32
  }
  func.func @transform_3(%arg0: i32) -> (i32, i32) {
    %c0_i32 = arith.constant 0 : i32
    %c0_i32_0 = arith.constant 0 : i32
    %c0_i32_1 = arith.constant 0 : i32
    return %c0_i32, %c0_i32_0 : i32, i32
  }
  func.func @transform_4(%arg0: i32) -> (i32, i32) {
    %c0_i32 = arith.constant 0 : i32
    %c0_i32_0 = arith.constant 0 : i32
    %c0_i32_1 = arith.constant 0 : i32
    return %c0_i32, %c0_i32_0 : i32, i32
  }
  func.func @transform_5(%arg0: i32) -> (i32, i32) {
    %c0_i32 = arith.constant 0 : i32
    %c0_i32_0 = arith.constant 0 : i32
    %c0_i32_1 = arith.constant 0 : i32
    return %c0_i32, %c0_i32_0 : i32, i32
  }
  func.func @transform_6(%arg0: i32) -> (i32, i32) {
    %c0_i32 = arith.constant 0 : i32
    %c0_i32_0 = arith.constant 0 : i32
    %c0_i32_1 = arith.constant 0 : i32
    return %c0_i32, %c0_i32_0 : i32, i32
  }
  func.func @transform_7(%arg0: i32) -> (i32, i32) {
    %c0_i32 = arith.constant 0 : i32
    %c0_i32_0 = arith.constant 0 : i32
    return %arg0, %c0_i32 : i32, i32
  }
}

</mosaic_0001>

<llo_original>
// kernel: tpu_custom_call.1
$region0: #{tpu_custom_call.1}
  #allocation0 [shape = 'u32[]', space=smem, size = 0x4, offset = 0x4, fixed_abs, tag = 'smem constant byte address 0x4 - core index']
  #allocation1 [shape = 'u32[144,128]{1,0:T(1,128)}', space=vmem, size = 0x12000, scoped, tag = 'internal scratch']
  #allocation2 [shape = 'f32[1,1]{1,0:T(1,128)S(1)}', space=vmem, size = 0x200, scoped, tag = 'scoped memory for tpu_custom_call.1']
  %s0 = inlined_call_operand.vmem [shape: f32[8,16], index: 0, kind: input, shape index: {}]
  %s1 = inlined_call_operand.vmem [shape: f32[16,64], index: 1, kind: input, shape index: {}]
  %s2 = inlined_call_operand.vmem [shape: f32[1,64], index: 2, kind: input, shape index: {}]
  %s3 = inlined_call_operand.vmem [shape: f32[64,32], index: 3, kind: input, shape index: {}]
  %s4 = inlined_call_operand.vmem [shape: f32[1,32], index: 4, kind: input, shape index: {}]
  %s5 = inlined_call_operand.vmem [shape: f32[32,1], index: 5, kind: input, shape index: {}]
  %s6 = inlined_call_operand.<no memory space> [shape: f32[1,1], index: 6, kind: input, shape index: {}]
  %s7 = inlined_call_operand.vmem [shape: f32[8,1], index: 7, kind: output, shape index: {}]
  %s8 = sld [smem:[#allocation0]]
  $region38: #{tpu_custom_call.1} parent=0
    _
  %s10 = ssub.s32 1, %s8
  %s11 = scalar_select 0, %s10, %s8
  %v12 = vstv %s6
  %13 = vst [vmem:[#allocation2] sm:$0x1] %v12
  // Predicated region
  $region2: #{tpu_custom_call.1} parent=0 // pred_check
    _
  $region3: #{tpu_custom_call.1} parent=0 // pred_check_branch
    %15 = sbr.rel (0) target = $region5
  $region4: #{tpu_custom_call.1} parent=0 // pred_region
    _
  $region5: #{tpu_custom_call.1} parent=0 // pred_fallthru
    _
  // Predicated region
  $region6: #{tpu_custom_call.1} parent=0 // pred_check
    _
  $region7: #{tpu_custom_call.1} parent=0 // pred_check_branch
    %17 = sbr.rel (0) target = $region9
  $region8: #{tpu_custom_call.1} parent=0 // pred_region
    _
  $region9: #{tpu_custom_call.1} parent=0 // pred_fallthru
    _
  // Predicated region
  $region10: #{tpu_custom_call.1} parent=0 // pred_check
    _
  $region11: #{tpu_custom_call.1} parent=0 // pred_check_branch
    %19 = sbr.rel (0) target = $region13
  $region12: #{tpu_custom_call.1} parent=0 // pred_region
    _
  $region13: #{tpu_custom_call.1} parent=0 // pred_fallthru
    _
  // Predicated region
  $region14: #{tpu_custom_call.1} parent=0 // pred_check
    _
  $region15: #{tpu_custom_call.1} parent=0 // pred_check_branch
    %21 = sbr.rel (0) target = $region17
  $region16: #{tpu_custom_call.1} parent=0 // pred_region
    _
  $region17: #{tpu_custom_call.1} parent=0 // pred_fallthru
    _
  // Predicated region
  $region18: #{tpu_custom_call.1} parent=0 // pred_check
    _
  $region19: #{tpu_custom_call.1} parent=0 // pred_check_branch
    %23 = sbr.rel (0) target = $region21
  $region20: #{tpu_custom_call.1} parent=0 // pred_region
    _
  $region21: #{tpu_custom_call.1} parent=0 // pred_fallthru
    _
  // Predicated region
  $region22: #{tpu_custom_call.1} parent=0 // pred_check
    _
  $region23: #{tpu_custom_call.1} parent=0 // pred_check_branch
    %25 = sbr.rel (0) target = $region25
  $region24: #{tpu_custom_call.1} parent=0 // pred_region
    _
  $region25: #{tpu_custom_call.1} parent=0 // pred_fallthru
    _
  // Predicated region
  $region26: #{tpu_custom_call.1} parent=0 // pred_check
    _
  $region27: #{tpu_custom_call.1} parent=0 // pred_check_branch
    %27 = sbr.rel (0) target = $region29
  $region28: #{tpu_custom_call.1} parent=0 // pred_region
    _
  $region29: #{tpu_custom_call.1} parent=0 // pred_fallthru
    _
  %v28 = vld [vmem:[%s0] sm:$0xff]
  %v29 = vld [vmem:[%s1] sm:$0xff]
  %v30 = vld [vmem:[%s1 + $0x8] sm:$0xff]
  %v31 = vld [vmem:[%s2] sm:$0x1]
  %v33 = vlaneseq
  %v34 = vshrl.u32 %v33, 7
  %v35 = vsub.s32 0, %v34
  %v36 = vrot.slane %v31, %v35
  %vm38 = vcmask 130048
  %v40 = vsel %vm38, %v28, 0
  %42 = vmatprep.subr.mxu0 0.0
  %43 = vmatpush1.msra.mxu0 %v29
  %44 = vmatprep.subr.mxu0 0.0
  %45 = vmatpush1.msra.mxu0 %v30
  %46 = vmatprep.subr.mxu0 0.0
  %47 = vmatpush1.msra.mxu0 0.0
  %48 = vmatprep.subr.mxu0 0.0
  %49 = vmatpush1.msra.mxu0 0.0
  %50 = vmatprep.subr.mxu0 0.0
  %51 = vmatpush1.msra.mxu0 0.0
  %52 = vmatprep.subr.mxu0 0.0
  %53 = vmatpush1.msra.mxu0 0.0
  %54 = vmatprep.subr.mxu0 0.0
  %55 = vmatpush1.msra.mxu0 0.0
  %56 = vmatprep.subr.mxu0 0.0
  %57 = vmatpush1.msra.mxu0 0.0
  %58 = vmatprep.subr.mxu0 0.0
  %59 = vmatpush1.msra.mxu0 0.0
  %60 = vmatprep.subr.mxu0 0.0
  %61 = vmatpush1.msra.mxu0 0.0
  %62 = vmatprep.subr.mxu0 0.0
  %63 = vmatpush1.msra.mxu0 0.0
  %64 = vmatprep.subr.mxu0 0.0
  %65 = vmatpush1.msra.mxu0 0.0
  %66 = vmatprep.subr.mxu0 0.0
  %67 = vmatpush1.msra.mxu0 0.0
  %68 = vmatprep.subr.mxu0 0.0
  %69 = vmatpush1.msra.mxu0 0.0
  %70 = vmatprep.subr.mxu0 0.0
  %71 = vmatpush1.msra.mxu0 0.0
  %72 = vmatprep.subr.mxu0 0.0
  %73 = vmatpush1.msra.mxu0 0.0
  %74 = vmatprep.subr.mxu0 0.0
  %75 = vmatpush1.msra.mxu0 0.0
  %76 = vmatprep.subr.mxu0 0.0
  %77 = vmatpush1.msra.mxu0 0.0
  %78 = vmatprep.subr.mxu0 0.0
  %79 = vmatpush1.msra.mxu0 0.0
  %80 = vmatprep.subr.mxu0 0.0
  %81 = vmatpush1.msra.mxu0 0.0
  %82 = vmatprep.subr.mxu0 0.0
  %83 = vmatpush1.msra.mxu0 0.0
  %84 = vmatprep.subr.mxu0 0.0
  %85 = vmatpush1.msra.mxu0 0.0
  %86 = vmatprep.subr.mxu0 0.0
  %87 = vmatpush1.msra.mxu0 0.0
  %88 = vmatprep.subr.mxu0 0.0
  %89 = vmatpush1.msra.mxu0 0.0
  %90 = vmatprep.subr.mxu0 0.0
  %91 = vmatpush1.msra.mxu0 0.0
  %92 = vmatprep.subr.mxu0 0.0
  %93 = vmatpush1.msra.mxu0 0.0
  %94 = vmatprep.subr.mxu0 0.0
  %95 = vmatpush1.msra.mxu0 0.0
  %96 = vmatprep.subr.mxu0 0.0
  %97 = vmatpush1.msra.mxu0 0.0
  %98 = vmatprep.subr.mxu0 0.0
  %99 = vmatpush1.msra.mxu0 0.0
  %100 = vmatprep.subr.mxu0 0.0
  %101 = vmatpush1.msra.mxu0 0.0
  %102 = vmatprep.subr.mxu0 0.0
  %103 = vmatpush1.msra.mxu0 0.0
  %104 = vmatprep.subr.mxu0 0.0
  %105 = vmatpush1.msra.mxu0 0.0
  %106 = vmatprep.mubr.f32.mxu0 0.0
  %107 = vmatmul.mubr.f32.gmra.mrb[0].mxu0 %v40
  %v108 = vpop.f32.mrb[0].mxu0
  %v109 = vadd.f32 %v36, %v108
  %v110 = vpop.f32.mrb[0].mxu0
  %111 = vdwg.mxu0
  %v112 = vmax.f32 %v109, 0.0
  %v113 = vld [vmem:[%s3] sm:$0xff]
  %v114 = vld [vmem:[%s3 + $0x8] sm:$0xff]
  %v115 = vld [vmem:[%s3 + $0x10] sm:$0xff]
  %v116 = vld [vmem:[%s3 + $0x18] sm:$0xff]
  %v117 = vld [vmem:[%s3 + $0x20] sm:$0xff]
  %v118 = vld [vmem:[%s3 + $0x28] sm:$0xff]
  %v119 = vld [vmem:[%s3 + $0x30] sm:$0xff]
  %v120 = vld [vmem:[%s3 + $0x38] sm:$0xff]
  %v121 = vld [vmem:[%s4] sm:$0x1]
  %v123 = vlaneseq
  %v124 = vshrl.u32 %v123, 7
  %v125 = vsub.s32 0, %v124
  %v126 = vrot.slane %v121, %v125
  %vm128 = vcmask 523264
  %v130 = vsel %vm128, %v112, 0
  %132 = vmatprep.subr.mxu0 0.0
  %133 = vmatpush1.msra.mxu0 %v113
  %134 = vmatprep.subr.mxu0 0.0
  %135 = vmatpush1.msra.mxu0 %v114
  %136 = vmatprep.subr.mxu0 0.0
  %137 = vmatpush1.msra.mxu0 %v115
  %138 = vmatprep.subr.mxu0 0.0
  %139 = vmatpush1.msra.mxu0 %v116
  %140 = vmatprep.subr.mxu0 0.0
  %141 = vmatpush1.msra.mxu0 %v117
  %142 = vmatprep.subr.mxu0 0.0
  %143 = vmatpush1.msra.mxu0 %v118
  %144 = vmatprep.subr.mxu0 0.0
  %145 = vmatpush1.msra.mxu0 %v119
  %146 = vmatprep.subr.mxu0 0.0
  %147 = vmatpush1.msra.mxu0 %v120
  %148 = vmatprep.subr.mxu0 0.0
  %149 = vmatpush1.msra.mxu0 0.0
  %150 = vmatprep.subr.mxu0 0.0
  %151 = vmatpush1.msra.mxu0 0.0
  %152 = vmatprep.subr.mxu0 0.0
  %153 = vmatpush1.msra.mxu0 0.0
  %154 = vmatprep.subr.mxu0 0.0
  %155 = vmatpush1.msra.mxu0 0.0
  %156 = vmatprep.subr.mxu0 0.0
  %157 = vmatpush1.msra.mxu0 0.0
  %158 = vmatprep.subr.mxu0 0.0
  %159 = vmatpush1.msra.mxu0 0.0
  %160 = vmatprep.subr.mxu0 0.0
  %161 = vmatpush1.msra.mxu0 0.0
  %162 = vmatprep.subr.mxu0 0.0
  %163 = vmatpush1.msra.mxu0 0.0
  %164 = vmatprep.subr.mxu0 0.0
  %165 = vmatpush1.msra.mxu0 0.0
  %166 = vmatprep.subr.mxu0 0.0
  %167 = vmatpush1.msra.mxu0 0.0
  %168 = vmatprep.subr.mxu0 0.0
  %169 = vmatpush1.msra.mxu0 0.0
  %170 = vmatprep.subr.mxu0 0.0
  %171 = vmatpush1.msra.mxu0 0.0
  %172 = vmatprep.subr.mxu0 0.0
  %173 = vmatpush1.msra.mxu0 0.0
  %174 = vmatprep.subr.mxu0 0.0
  %175 = vmatpush1.msra.mxu0 0.0
  %176 = vmatprep.subr.mxu0 0.0
  %177 = vmatpush1.msra.mxu0 0.0
  %178 = vmatprep.subr.mxu0 0.0
  %179 = vmatpush1.msra.mxu0 0.0
  %180 = vmatprep.subr.mxu0 0.0
  %181 = vmatpush1.msra.mxu0 0.0
  %182 = vmatprep.subr.mxu0 0.0
  %183 = vmatpush1.msra.mxu0 0.0
  %184 = vmatprep.subr.mxu0 0.0
  %185 = vmatpush1.msra.mxu0 0.0
  %186 = vmatprep.subr.mxu0 0.0
  %187 = vmatpush1.msra.mxu0 0.0
  %188 = vmatprep.subr.mxu0 0.0
  %189 = vmatpush1.msra.mxu0 0.0
  %190 = vmatprep.subr.mxu0 0.0
  %191 = vmatpush1.msra.mxu0 0.0
  %192 = vmatprep.subr.mxu0 0.0
  %193 = vmatpush1.msra.mxu0 0.0
  %194 = vmatprep.subr.mxu0 0.0
  %195 = vmatpush1.msra.mxu0 0.0
  %196 = vmatprep.mubr.f32.mxu0 0.0
  %197 = vmatmul.mubr.f32.gmra.mrb[0].mxu0 %v130
  %v198 = vpop.f32.mrb[0].mxu0
  %v199 = vadd.f32 %v126, %v198
  %v200 = vpop.f32.mrb[0].mxu0
  %201 = vdwg.mxu0
  %v202 = vmax.f32 %v199, 0.0
  %v203 = vld [vmem:[%s5] sm:$0xff]
  %v204 = vld [vmem:[%s5 + $0x8] sm:$0xff]
  %v205 = vld [vmem:[%s5 + $0x10] sm:$0xff]
  %v206 = vld [vmem:[%s5 + $0x18] sm:$0xff]
  %v207 = vld [vmem:[#allocation2] sm:$0x1]
  %v209 = vlaneseq
  %v210 = vshrl.u32 %v209, 7
  %v211 = vsub.s32 0, %v210
  %v212 = vrot.slane %v207, %v211
  %vm214 = vcmask 261120
  %v216 = vsel %vm214, %v202, 0
  %218 = vmatprep.subr.mxu0 0.0
  %219 = vmatpush1.msra.mxu0 %v203
  %220 = vmatprep.subr.mxu0 0.0
  %221 = vmatpush1.msra.mxu0 %v204
  %222 = vmatprep.subr.mxu0 0.0
  %223 = vmatpush1.msra.mxu0 %v205
  %224 = vmatprep.subr.mxu0 0.0
  %225 = vmatpush1.msra.mxu0 %v206
  %226 = vmatprep.subr.mxu0 0.0
  %227 = vmatpush1.msra.mxu0 0.0
  %228 = vmatprep.subr.mxu0 0.0
  %229 = vmatpush1.msra.mxu0 0.0
  %230 = vmatprep.subr.mxu0 0.0
  %231 = vmatpush1.msra.mxu0 0.0
  %232 = vmatprep.subr.mxu0 0.0
  %233 = vmatpush1.msra.mxu0 0.0
  %234 = vmatprep.subr.mxu0 0.0
  %235 = vmatpush1.msra.mxu0 0.0
  %236 = vmatprep.subr.mxu0 0.0
  %237 = vmatpush1.msra.mxu0 0.0
  %238 = vmatprep.subr.mxu0 0.0
  %239 = vmatpush1.msra.mxu0 0.0
  %240 = vmatprep.subr.mxu0 0.0
  %241 = vmatpush1.msra.mxu0 0.0
  %242 = vmatprep.subr.mxu0 0.0
  %243 = vmatpush1.msra.mxu0 0.0
  %244 = vmatprep.subr.mxu0 0.0
  %245 = vmatpush1.msra.mxu0 0.0
  %246 = vmatprep.subr.mxu0 0.0
  %247 = vmatpush1.msra.mxu0 0.0
  %248 = vmatprep.subr.mxu0 0.0
  %249 = vmatpush1.msra.mxu0 0.0
  %250 = vmatprep.subr.mxu0 0.0
  %251 = vmatpush1.msra.mxu0 0.0
  %252 = vmatprep.subr.mxu0 0.0
  %253 = vmatpush1.msra.mxu0 0.0
  %254 = vmatprep.subr.mxu0 0.0
  %255 = vmatpush1.msra.mxu0 0.0
  %256 = vmatprep.subr.mxu0 0.0
  %257 = vmatpush1.msra.mxu0 0.0
  %258 = vmatprep.subr.mxu0 0.0
  %259 = vmatpush1.msra.mxu0 0.0
  %260 = vmatprep.subr.mxu0 0.0
  %261 = vmatpush1.msra.mxu0 0.0
  %262 = vmatprep.subr.mxu0 0.0
  %263 = vmatpush1.msra.mxu0 0.0
  %264 = vmatprep.subr.mxu0 0.0
  %265 = vmatpush1.msra.mxu0 0.0
  %266 = vmatprep.subr.mxu0 0.0
  %267 = vmatpush1.msra.mxu0 0.0
  %268 = vmatprep.subr.mxu0 0.0
  %269 = vmatpush1.msra.mxu0 0.0
  %270 = vmatprep.subr.mxu0 0.0
  %271 = vmatpush1.msra.mxu0 0.0
  %272 = vmatprep.subr.mxu0 0.0
  %273 = vmatpush1.msra.mxu0 0.0
  %274 = vmatprep.subr.mxu0 0.0
  %275 = vmatpush1.msra.mxu0 0.0
  %276 = vmatprep.subr.mxu0 0.0
  %277 = vmatpush1.msra.mxu0 0.0
  %278 = vmatprep.subr.mxu0 0.0
  %279 = vmatpush1.msra.mxu0 0.0
  %280 = vmatprep.subr.mxu0 0.0
  %281 = vmatpush1.msra.mxu0 0.0
  %282 = vmatprep.mubr.f32.mxu0 0.0
  %283 = vmatmul.mubr.f32.gmra.mrb[0].mxu0 %v216
  %v284 = vpop.f32.mrb[0].mxu0
  %v285 = vadd.f32 %v212, %v284
  %v286 = vpop.f32.mrb[0].mxu0
  %287 = vdwg.mxu0
  %v288 = vxor.u32 %v285, 2147483648
  %v289 = vmul.f32 %v288, 1.442695
  %v290 = vpow.pop %v289
  %v291 = vadd.f32 %v290, 1.0
  %v292 = vrcp.pop %v291
  %v293 = vmul.f32 1.0, %v292
  %vm294 = vcmask 7168
  %295 = vst.msk [vmem:[%s7] sm:$0xff] %vm294, %v293
  // Predicated region
  $region30: #{tpu_custom_call.1} parent=0 // pred_check
    _
  $region31: #{tpu_custom_call.1} parent=0 // pred_check_branch
    %297 = sbr.rel (0) target = $region33
  $region32: #{tpu_custom_call.1} parent=0 // pred_region
    _
  $region33: #{tpu_custom_call.1} parent=0 // pred_fallthru
    _
  // Predicated region
  $region34: #{tpu_custom_call.1} parent=0 // pred_check
    _
  $region35: #{tpu_custom_call.1} parent=0 // pred_check_branch
    %299 = sbr.rel (0) target = $region37
  $region36: #{tpu_custom_call.1} parent=0 // pred_region
    _
  $region37: #{tpu_custom_call.1} parent=0 // pred_fallthru
    _

</llo_original>
